<compile_context>
chip_gen: v7x
topology: tpu7x:2x2x1
jax: 0.10.0
libtpu: 0.0.40
codegen_flags: <defaults>
</compile_context>

<pallas_src>
import jax
import jax.numpy as jnp
from jax.experimental import pallas as pl
from jax.experimental.pallas import tpu as pltpu


def _round_up(v, m):
    return ((v + m - 1) // m) * m


def _linear_relu_kernel(x_ref, wt_ref, b_ref, o_ref):
    # One batch tile per grid step:
    #   MXU: (bm, K) x (K, N_pad) -> f32 accumulator
    #   VPU: f32 bias broadcast-add + ReLU, then lane-dense store (N_pad % 128 == 0)
    acc = jnp.dot(x_ref[...], wt_ref[...], preferred_element_type=jnp.float32)
    acc = acc + b_ref[...]                      # (bm, N_pad) + (1, N_pad), f32
    o_ref[...] = jnp.maximum(acc, 0.0).astype(o_ref.dtype)


def prepare_linear_params(weight, bias, *, compute_dtype=jnp.float32):
    """One-time (load-time) parameter prep — NOT on the per-call hot path.

    weight: (N, K) PyTorch nn.Linear layout
    bias:   (N,)
    Returns (wt_pad (K, N_pad), b_pad (1, N_pad) f32, N) with N_pad a multiple
    of 128, zero-padded so padded output columns are exactly relu(0 + 0) = 0.
    `compute_dtype=jnp.bfloat16` enables the bf16 MXU path (v6e/v7x win).
    """
    N, K = weight.shape
    n_pad = _round_up(N, 128)                   # lane-dense output width
    wt_pad = (jnp.zeros((K, n_pad), compute_dtype)
              .at[:, :N].set(weight.T.astype(compute_dtype)))
    # Bias kept f32: added to the f32 accumulator (v5e VPU has no bf16).
    b_pad = jnp.zeros((1, n_pad), jnp.float32).at[:, :N].set(bias.astype(jnp.float32))
    return wt_pad, b_pad, N


def linear_qnet_forward(x, wt_pad, b_pad, n_out, *, bm_cap=1024,
                        min_pallas_rows=512, slice_output=True,
                        core_parallel=False):
    """Pallas equivalent of F.relu(nn.Linear(input_size, output_size)(x)).

    x:      (B, K)
    wt_pad: (K, N_pad)   (pre-transposed, N zero-padded to 128-multiple)
    b_pad:  (1, N_pad)   f32
    returns (B, n_out) f32   (or (B, N_pad) lane-dense if slice_output=False)
    """
    B, K = x.shape
    K2, n_pad = wt_pad.shape
    assert K == K2
    x = x.astype(wt_pad.dtype)

    # Small-batch fallback: pallas_call dispatch + pipeline prologue dwarfs the
    # ~2*B*K*N flops here; a fused XLA dot+relu matches or beats it.
    if B < min_pallas_rows:
        out = jnp.maximum(
            jnp.dot(x, wt_pad, preferred_element_type=jnp.float32) + b_pad, 0.0)
        return out[:, :n_out] if slice_output else out

    # Batch tile selection:
    #  * single tile for modest B,
    #  * >=2 grid steps once B is large (lets v7x shard across both TCs),
    #  * capped at bm_cap (per-tile VMEM ~ (K + N_pad)*4*bm, tiny even at 1024).
    if B <= bm_cap:
        bm = _round_up(pl.cdiv(B, 2), 8) if B >= 1024 else B
    else:
        bm = bm_cap
    grid = (pl.cdiv(B, bm),)

    itemsize = jnp.dtype(wt_pad.dtype).itemsize
    bytes_accessed = (itemsize * (x.size + wt_pad.size)
                      + 4 * (b_pad.size + B * n_pad))
    cost = pl.CostEstimate(
        flops=2 * B * K * n_pad,
        transcendentals=0,
        bytes_accessed=bytes_accessed,
    )

    batch_sem = pltpu.CORE_PARALLEL if core_parallel else pltpu.PARALLEL

    out_padded = pl.pallas_call(
        _linear_relu_kernel,
        out_shape=jax.ShapeDtypeStruct((B, n_pad), jnp.float32),
        grid_spec=pl.GridSpec(
            grid=grid,
            in_specs=[
                pl.BlockSpec((bm, K), lambda i: (i, 0)),       # streamed over batch
                pl.BlockSpec((K, n_pad), lambda i: (0, 0)),    # resident in VMEM
                pl.BlockSpec((1, n_pad), lambda i: (0, 0)),    # resident in VMEM
            ],
            out_specs=pl.BlockSpec((bm, n_pad), lambda i: (i, 0)),
        ),
        compiler_params=pltpu.CompilerParams(
            dimension_semantics=(batch_sem,),
        ),
        cost_estimate=cost,
    )(x, wt_pad, b_pad)

    # Prefer slice_output=False (or jit this wrapper) so the (B, n_out) view
    # doesn't cost a second HBM pass.
    return out_padded[:, :n_out] if slice_output else out_padded


if __name__ == "__main__":
    input_size, output_size = 32, 16

    key = jax.random.PRNGKey(0)
    kx, kw, kb, kx2 = jax.random.split(key, 4)

    # Deterministic parameter init mimicking torch.nn.Linear defaults:
    # U(-1/sqrt(in), 1/sqrt(in)) for both weight and bias.
    bound = 1.0 / (input_size ** 0.5)
    weight = jax.random.uniform(kw, (output_size, input_size), jnp.float32,
                                minval=-bound, maxval=bound)
    bias = jax.random.uniform(kb, (output_size,), jnp.float32,
                              minval=-bound, maxval=bound)

    # --- 1) Spec-literal small batch, forced through the Pallas kernel -------
    wt_pad, b_pad, n_out = prepare_linear_params(weight, bias)
    x_small = jax.random.normal(kx, (8, input_size), jnp.float32)
    out_small = jax.block_until_ready(
        linear_qnet_forward(x_small, wt_pad, b_pad, n_out, min_pallas_rows=0))
    ref_small = jnp.maximum(x_small @ weight.T + bias, 0.0)
    assert out_small.shape == (8, output_size)
    assert jnp.allclose(out_small, ref_small, atol=1e-5, rtol=1e-5)

    # --- 2) Larger batch: tiled 2-step grid, slice fused away by jit ---------
    fwd = jax.jit(lambda xb: linear_qnet_forward(xb, wt_pad, b_pad, n_out))
    x_big = jax.random.normal(kx2, (1024, input_size), jnp.float32)
    out_big = jax.block_until_ready(fwd(x_big))
    ref_big = jnp.maximum(x_big @ weight.T + bias, 0.0)
    assert out_big.shape == (1024, output_size)
    assert jnp.allclose(out_big, ref_big, atol=1e-5, rtol=1e-5)

    # --- 3) Optional bf16 compute path (v6e/v7x DMA/MXU win), f32 accumulate -
    wt_bf16, b_bf16, _ = prepare_linear_params(weight, bias,
                                               compute_dtype=jnp.bfloat16)
    fwd_bf16 = jax.jit(lambda xb: linear_qnet_forward(xb, wt_bf16, b_bf16, n_out))
    out_bf16 = jax.block_until_ready(fwd_bf16(x_big))
    assert out_bf16.shape == (1024, output_size)
    assert jnp.allclose(out_bf16, ref_big, atol=2e-2, rtol=2e-2)

    print("KERNEL_OK")
</pallas_src>

<mosaic_0001>
module attributes {stable_mosaic.version = 11 : i64} {
  func.func @_linear_relu_kernel(%arg0: i32, %arg1: memref<8x32xf32, #tpu.memory_space<vmem>>, %arg2: memref<32x128xf32, #tpu.memory_space<vmem>>, %arg3: memref<1x128xf32, #tpu.memory_space<vmem>>, %arg4: memref<8x128xf32, #tpu.memory_space<vmem>>) attributes {dimension_semantics = [#tpu.dimension_semantics<parallel>], iteration_bounds = array<i64: 1>, scalar_prefetch = 0 : i64, scratch_operands = 0 : i64, tpu.core_type = #tpu.core_type<tc>, window_params = [{transform_indices = @transform_0, window_bounds = array<i64: 8, 32>}, {pipeline_mode = #tpu.pipeline_mode<synchronous>, transform_indices = @transform_1, window_bounds = array<i64: 32, 128>}, {pipeline_mode = #tpu.pipeline_mode<synchronous>, transform_indices = @transform_2, window_bounds = array<i64: 1, 128>}, {transform_indices = @transform_3, window_bounds = array<i64: 8, 128>}]} {
    %c0 = arith.constant 0 : index
    %c0_0 = arith.constant 0 : index
    %0 = vector.load %arg1[%c0, %c0_0] : memref<8x32xf32, #tpu.memory_space<vmem>>, vector<8x32xf32>
    %c0_1 = arith.constant 0 : index
    %c0_2 = arith.constant 0 : index
    %1 = vector.load %arg2[%c0_1, %c0_2] : memref<32x128xf32, #tpu.memory_space<vmem>>, vector<32x128xf32>
    %cst = arith.constant dense<0.000000e+00> : vector<8x128xf32>
    %2 = tpu.matmul %0, %1, %cst {dimension_numbers = #tpu.dot_dimension_numbers<[1], [0], [0], [1], [0, 0, 1, 1], [], []>} : vector<8x32xf32>, vector<32x128xf32>, vector<8x128xf32> -> vector<8x128xf32>
    %c0_3 = arith.constant 0 : index
    %c0_4 = arith.constant 0 : index
    %3 = vector.load %arg3[%c0_3, %c0_4] : memref<1x128xf32, #tpu.memory_space<vmem>>, vector<1x128xf32>
    %4 = vector.broadcast %3 : vector<1x128xf32> to vector<8x128xf32>
    %5 = arith.addf %2, %4 : vector<8x128xf32>
    %cst_5 = arith.constant 0.000000e+00 : f32
    %6 = vector.broadcast %cst_5 : f32 to vector<8x128xf32>
    %7 = arith.maximumf %5, %6 : vector<8x128xf32>
    %c0_6 = arith.constant 0 : index
    %c0_7 = arith.constant 0 : index
    %8 = vector.load %arg4[%c0_6, %c0_7] : memref<8x128xf32, #tpu.memory_space<vmem>>, vector<8x128xf32>
    tpu.vector_store %arg4[%c0_6, %c0_7], %7 {strides = array<i32>} : memref<8x128xf32, #tpu.memory_space<vmem>>, vector<8x128xf32>,
    return
  }
  func.func @transform_0(%arg0: i32) -> (i32, i32) {
    %c0_i32 = arith.constant 0 : i32
    %c0_i32_0 = arith.constant 0 : i32
    return %arg0, %c0_i32 : i32, i32
  }
  func.func @transform_1(%arg0: i32) -> (i32, i32) {
    %c0_i32 = arith.constant 0 : i32
    %c0_i32_0 = arith.constant 0 : i32
    %c0_i32_1 = arith.constant 0 : i32
    return %c0_i32, %c0_i32_0 : i32, i32
  }
  func.func @transform_2(%arg0: i32) -> (i32, i32) {
    %c0_i32 = arith.constant 0 : i32
    %c0_i32_0 = arith.constant 0 : i32
    %c0_i32_1 = arith.constant 0 : i32
    return %c0_i32, %c0_i32_0 : i32, i32
  }
  func.func @transform_3(%arg0: i32) -> (i32, i32) {
    %c0_i32 = arith.constant 0 : i32
    %c0_i32_0 = arith.constant 0 : i32
    return %arg0, %c0_i32 : i32, i32
  }
}

</mosaic_0001>

<llo_original>
// kernel: tpu_custom_call.1
$region0: #{tpu_custom_call.1}
  #allocation0 [shape = 'u32[]', space=smem, size = 0x4, offset = 0x4, fixed_abs, tag = 'smem constant byte address 0x4 - core index']
  #allocation1 [shape = 'u32[144,128]{1,0:T(1,128)}', space=vmem, size = 0x12000, scoped, tag = 'internal scratch']
  %s0 = inlined_call_operand.hbm [shape: f32[8,32], index: 0, kind: input, shape index: {}]
  %s1 = inlined_call_operand.hbm [shape: f32[32,128], index: 1, kind: input, shape index: {}]
  %s2 = inlined_call_operand.vmem [shape: f32[1,128], index: 2, kind: input, shape index: {}]
  %s3 = inlined_call_operand.hbm [shape: f32[8,128], index: 3, kind: output, shape index: {}]
  %s4 = sld [smem:[#allocation0]]
  $region30: #{tpu_custom_call.1} parent=0
    _
  %s6 = ssub.s32 1, %s4
  %s7 = scalar_select 0, %s6, %s4
  $region1: #{tpu_custom_call.1} parent=0
    #allocation2 [shape = 'u8[4096]{0}', space=vmem, size = 0x1000, scoped, tag = 'input window, operand 0, single buffered']
    #allocation3 [shape = 's32[1]{0}', space=sflag, size = 0x4, scoped, tag = 'scoped memory for tpu_custom_call.1']
    #allocation4 [shape = 's32[1]{0}', space=sflag, size = 0x4, scoped, tag = 'scoped memory for tpu_custom_call.1']
    #allocation5 [shape = 'u8[16384]{0}', space=vmem, size = 0x4000, scoped, tag = 'input window, operand 1, single buffered']
    #allocation6 [shape = 's32[1]{0}', space=sflag, size = 0x4, scoped, tag = 'scoped memory for tpu_custom_call.1']
    #allocation7 [shape = 'u8[4096]{0}', space=vmem, size = 0x1000, scoped, tag = 'output window, operand 0, single buffered']
    %8 = vsyncpa [#allocation3], 0
    %9 = vsyncpa [#allocation6], 0
    %10 = vsyncpa [#allocation4], 0
    // Predicated region
    $region2: #{tpu_custom_call.1} parent=1 // pred_check
      _
    $region3: #{tpu_custom_call.1} parent=1 // pred_check_branch
      %12 = sbr.rel (0) target = $region5
    $region4: #{tpu_custom_call.1} parent=1 // pred_region
      %s14 = ssub.s32 128, 128
      %15 = vsyncadd [#allocation3], %s14
      %s17 = sshll.u32 [#allocation2], 4
      %s18 = int_to_ptr.vmem [resolvable:$true] %s17
      %20 = dma.hbm_to_vmem [thread:$0]  %s0, 128, %s18, [#allocation3]
    $region5: #{tpu_custom_call.1} parent=1 // pred_fallthru
      _
    // Predicated region
    $region6: #{tpu_custom_call.1} parent=1 // pred_check
      _
    $region7: #{tpu_custom_call.1} parent=1 // pred_check_branch
      %22 = sbr.rel (0) target = $region9
    $region8: #{tpu_custom_call.1} parent=1 // pred_region
      %s24 = ssub.s32 512, 512
      %25 = vsyncadd [#allocation6], %s24
      %s26 = sshll.u32 [#allocation5], 4
      %s27 = int_to_ptr.vmem [resolvable:$true] %s26
      %32 = dma.hbm_to_vmem [thread:$0]  %s1, 512, %s27, [#allocation6], 128, 128, 8
    $region9: #{tpu_custom_call.1} parent=1 // pred_fallthru
      _
    // Predicated region
    $region10: #{tpu_custom_call.1} parent=1 // pred_check
      _
    $region11: #{tpu_custom_call.1} parent=1 // pred_check_branch
      %34 = sbr.rel (0) target = $region13
    $region12: #{tpu_custom_call.1} parent=1 // pred_region
      _
    $region13: #{tpu_custom_call.1} parent=1 // pred_fallthru
      _
    // Predicated region
    $region14: #{tpu_custom_call.1} parent=1 // pred_check
      _
    $region15: #{tpu_custom_call.1} parent=1 // pred_check_branch
      %36 = sbr.rel (0) target = $region17
    $region16: #{tpu_custom_call.1} parent=1 // pred_region
      %37 = dma.done [#allocation3], 128
    $region17: #{tpu_custom_call.1} parent=1 // pred_fallthru
      _
    // Predicated region
    $region18: #{tpu_custom_call.1} parent=1 // pred_check
      _
    $region19: #{tpu_custom_call.1} parent=1 // pred_check_branch
      %39 = sbr.rel (0) target = $region21
    $region20: #{tpu_custom_call.1} parent=1 // pred_region
      %40 = dma.done [#allocation6], 512
    $region21: #{tpu_custom_call.1} parent=1 // pred_fallthru
      _
    %v41 = vld [vmem:[#allocation2] sm:$0xff]
    %v42 = vld [vmem:[#allocation5] sm:$0xff]
    %v43 = vld [vmem:[#allocation5 + $0x8] sm:$0xff]
    %v44 = vld [vmem:[#allocation5 + $0x10] sm:$0xff]
    %v45 = vld [vmem:[#allocation5 + $0x18] sm:$0xff]
    %v46 = vld [vmem:[%s2] sm:$0x1]
    %v48 = vlaneseq
    %v49 = vshrl.u32 %v48, 7
    %v50 = vsub.s32 0, %v49
    %v51 = vrot.slane %v46, %v50
    %vm53 = vcmask 261120
    %v55 = vsel %vm53, %v41, 0
    %57 = vmatprep.subr.mxu0 0.0
    %58 = vmatpush1.msra.mxu0 %v42
    %59 = vmatprep.subr.mxu0 0.0
    %60 = vmatpush1.msra.mxu0 %v43
    %61 = vmatprep.subr.mxu0 0.0
    %62 = vmatpush1.msra.mxu0 %v44
    %63 = vmatprep.subr.mxu0 0.0
    %64 = vmatpush1.msra.mxu0 %v45
    %65 = vmatprep.subr.mxu0 0.0
    %66 = vmatpush1.msra.mxu0 0.0
    %67 = vmatprep.subr.mxu0 0.0
    %68 = vmatpush1.msra.mxu0 0.0
    %69 = vmatprep.subr.mxu0 0.0
    %70 = vmatpush1.msra.mxu0 0.0
    %71 = vmatprep.subr.mxu0 0.0
    %72 = vmatpush1.msra.mxu0 0.0
    %73 = vmatprep.subr.mxu0 0.0
    %74 = vmatpush1.msra.mxu0 0.0
    %75 = vmatprep.subr.mxu0 0.0
    %76 = vmatpush1.msra.mxu0 0.0
    %77 = vmatprep.subr.mxu0 0.0
    %78 = vmatpush1.msra.mxu0 0.0
    %79 = vmatprep.subr.mxu0 0.0
    %80 = vmatpush1.msra.mxu0 0.0
    %81 = vmatprep.subr.mxu0 0.0
    %82 = vmatpush1.msra.mxu0 0.0
    %83 = vmatprep.subr.mxu0 0.0
    %84 = vmatpush1.msra.mxu0 0.0
    %85 = vmatprep.subr.mxu0 0.0
    %86 = vmatpush1.msra.mxu0 0.0
    %87 = vmatprep.subr.mxu0 0.0
    %88 = vmatpush1.msra.mxu0 0.0
    %89 = vmatprep.subr.mxu0 0.0
    %90 = vmatpush1.msra.mxu0 0.0
    %91 = vmatprep.subr.mxu0 0.0
    %92 = vmatpush1.msra.mxu0 0.0
    %93 = vmatprep.subr.mxu0 0.0
    %94 = vmatpush1.msra.mxu0 0.0
    %95 = vmatprep.subr.mxu0 0.0
    %96 = vmatpush1.msra.mxu0 0.0
    %97 = vmatprep.subr.mxu0 0.0
    %98 = vmatpush1.msra.mxu0 0.0
    %99 = vmatprep.subr.mxu0 0.0
    %100 = vmatpush1.msra.mxu0 0.0
    %101 = vmatprep.subr.mxu0 0.0
    %102 = vmatpush1.msra.mxu0 0.0
    %103 = vmatprep.subr.mxu0 0.0
    %104 = vmatpush1.msra.mxu0 0.0
    %105 = vmatprep.subr.mxu0 0.0
    %106 = vmatpush1.msra.mxu0 0.0
    %107 = vmatprep.subr.mxu0 0.0
    %108 = vmatpush1.msra.mxu0 0.0
    %109 = vmatprep.subr.mxu0 0.0
    %110 = vmatpush1.msra.mxu0 0.0
    %111 = vmatprep.subr.mxu0 0.0
    %112 = vmatpush1.msra.mxu0 0.0
    %113 = vmatprep.subr.mxu0 0.0
    %114 = vmatpush1.msra.mxu0 0.0
    %115 = vmatprep.subr.mxu0 0.0
    %116 = vmatpush1.msra.mxu0 0.0
    %117 = vmatprep.subr.mxu0 0.0
    %118 = vmatpush1.msra.mxu0 0.0
    %119 = vmatprep.subr.mxu0 0.0
    %120 = vmatpush1.msra.mxu0 0.0
    %121 = vmatprep.mubr.f32.mxu0 0.0
    %122 = vmatmul.mubr.f32.gmra.mrb[0].mxu0 %v55
    %v123 = vpop.f32.mrb[0].mxu0
    %v124 = vadd.f32 %v51, %v123
    %v125 = vpop.f32.mrb[0].mxu0
    %126 = vdwg.mxu0
    %v127 = vmax.f32 %v124, 0.0
    %128 = vst [vmem:[#allocation7] sm:$0xff] %v127
    // Predicated region
    $region22: #{tpu_custom_call.1} parent=1 // pred_check
      _
    $region23: #{tpu_custom_call.1} parent=1 // pred_check_branch
      %130 = sbr.rel (0) target = $region25
    $region24: #{tpu_custom_call.1} parent=1 // pred_region
      %s132 = ssub.s32 128, 128
      %133 = vsyncadd [#allocation4], %s132
      %s135 = sshll.u32 [#allocation7], 4
      %s136 = int_to_ptr.vmem [resolvable:$true] %s135
      %138 = dma.vmem_to_hbm [thread:$0]  %s136, 128, %s3, [#allocation4]
    $region25: #{tpu_custom_call.1} parent=1 // pred_fallthru
      _
    // Predicated region
    $region26: #{tpu_custom_call.1} parent=1 // pred_check
      _
    $region27: #{tpu_custom_call.1} parent=1 // pred_check_branch
      %140 = sbr.rel (0) target = $region29
    $region28: #{tpu_custom_call.1} parent=1 // pred_region
      %141 = dma.done [#allocation4], 128
    $region29: #{tpu_custom_call.1} parent=1 // pred_fallthru
      _
    %142 = vsyncpa [#allocation3], 1
    %143 = vsyncpa [#allocation6], 1
    %144 = vsyncpa [#allocation4], 1

</llo_original>
